<compile_context>
chip_gen: v7x
topology: tpu7x:2x2x1
jax: 0.10.0
libtpu: 0.0.40
codegen_flags: <defaults>
</compile_context>

<pallas_src>
import functools
import math

import jax
import jax.numpy as jnp
import numpy as np
from jax.experimental import pallas as pl
from jax.experimental.pallas import tpu as pltpu

MATMUL_DTYPE = jnp.bfloat16   # MXU-native operand dtype on v5e/v6e/v7x
MAX_ROW_TILE = 2048           # rows per grid step (upper bound)


def _round_up(n, m):
    return -(-n // m) * m


# ----------------------------------------------------------------------------
# Kernel: one batch tile of the fused 2-layer VdLinear MLP.
#   layer:  mean = x @ W.T + b ;  std = sqrt(1e-16 + (x*x) @ sigma.T)
#           out  = mean + std * eps   (eps ~ N(0,1) if sample else 0)
# Weights arrive pre-transposed ((D,hp) / (hp,O)), zero-padded and bf16-cast;
# sigma = exp(log_alpha) * W * W is precombined, so the kernel only does MXU
# matmuls (f32 accumulation) + VPU elementwise work per tile.
# ----------------------------------------------------------------------------
def _vd_mlp_kernel(*refs, sample: bool):
    if sample:
        (x_ref, eps1_ref, eps2_ref, w1t_ref, b1_ref, sig1t_ref,
         w2t_ref, b2_ref, sig2t_ref, y_ref) = refs
    else:
        x_ref, w1t_ref, b1_ref, w2t_ref, b2_ref, y_ref = refs

    x = x_ref[...]                                          # (TN, D)  bf16

    # ---- layer 1: VdLinear(input_dim, n_hid) ----
    mean1 = jnp.dot(x, w1t_ref[...],
                    preferred_element_type=jnp.float32) + b1_ref[...]
    if sample:
        xsq = x * x                                         # bf16 square
        var1 = jnp.dot(xsq, sig1t_ref[...],
                       preferred_element_type=jnp.float32)
        std1 = jnp.sqrt(1e-16 + var1)
        h = mean1 + std1 * eps1_ref[...].astype(jnp.float32)
    else:
        h = mean1                   # training=False, sample=False -> eps = 0

    # ---- ReLU between the two VdLinear layers ----
    h = jnp.maximum(h, 0.0)                                 # (TN, hp)  f32

    # ---- layer 2: VdLinear(n_hid, 2 * output_dim) ----
    hb = h.astype(MATMUL_DTYPE)
    mean2 = jnp.dot(hb, w2t_ref[...],
                    preferred_element_type=jnp.float32) + b2_ref[...]
    if sample:
        hsq = hb * hb                                       # bf16 square
        var2 = jnp.dot(hsq, sig2t_ref[...],
                       preferred_element_type=jnp.float32)
        std2 = jnp.sqrt(1e-16 + var2)
        y = mean2 + std2 * eps2_ref[...].astype(jnp.float32)
    else:
        y = mean2

    y_ref[...] = y.astype(y_ref.dtype)                      # (TN, O) narrow


# ----------------------------------------------------------------------------
# Parameter init (matches VdLinear.reset_parameters) and KL.
# ----------------------------------------------------------------------------
def init_vd_linear(key, n_in, n_out, alpha_shape=(1, 1)):
    stdv = 1.0 / math.sqrt(n_in)
    W = jax.random.uniform(key, (n_out, n_in), jnp.float32, -stdv, stdv)
    log_alpha = jnp.full(alpha_shape, -5.0, jnp.float32)
    b = jnp.zeros((1, n_out), jnp.float32)
    return W, b, log_alpha


def kl_loss(W, log_alpha):
    # W.nelement() * 0.5 * sum(log1p(exp(-log_alpha))) / log_alpha.nelement()
    kl = 0.5 * jnp.sum(jnp.log1p(jnp.exp(-log_alpha)))
    return W.size * kl / log_alpha.size


# ----------------------------------------------------------------------------
# One-time weight-side prep (cacheable across forward calls).
# ----------------------------------------------------------------------------
def prepare_vd_params(params):
    W1, b1, la1, W2, b2, la2 = params
    H, D = W1.shape                      # (n_hid, input_dim)
    O = W2.shape[0]                      # 2 * output_dim
    hp = _round_up(H, 128)               # lane-dense hidden dim

    def padded(src, rows, cols):
        out = jnp.zeros((rows, cols), MATMUL_DTYPE)
        return out.at[:src.shape[0], :src.shape[1]].set(src.astype(MATMUL_DTYPE))

    w1t = padded(W1.T, D, hp)
    sig1t = padded((jnp.exp(la1) * W1 * W1).T, D, hp)
    b1p = jnp.zeros((1, hp), jnp.float32).at[:, :H].set(b1)
    w2t = padded(W2.T, hp, O)
    sig2t = padded((jnp.exp(la2) * W2 * W2).T, hp, O)
    b2p = b2.astype(jnp.float32).reshape(1, O)
    return dict(D=D, H=H, O=O, hp=hp, w1t=w1t, b1p=b1p, sig1t=sig1t,
                w2t=w2t, b2p=b2p, sig2t=sig2t)


def _choose_row_tile(n, d, hp, o, sample):
    # Per-row VMEM footprint: double-buffered bf16 x (and eps) tiles plus an
    # upper bound on the f32 intermediates (h / mean / var / std).
    row_bytes = 2 * 2 * d + 4 * 4 * hp + 4 * 4 * o
    if sample:
        row_bytes += 2 * 2 * hp + 2 * 2 * o
    vmem_budget = 24 * 1024 * 1024
    tn_vmem = max(16, (vmem_budget // row_bytes) // 16 * 16)
    # Aim for >=4 grid steps so v7x's two TensorCores both get work.
    tn_split = _round_up(pl.cdiv(n, 4), 16)
    return max(16, min(MAX_ROW_TILE, tn_vmem, tn_split))


# ----------------------------------------------------------------------------
# Wrapper: batch-tiled pallas_call + KL glue.
# ----------------------------------------------------------------------------
def vd_linear_1L_hetero_forward(x, params, *, sample=False, seed=0, prepped=None):
    W1, _, la1, W2, _, la2 = params
    if prepped is None:
        prepped = prepare_vd_params(params)
    D, H, O, hp = prepped["D"], prepped["H"], prepped["O"], prepped["hp"]

    x2 = x.reshape(-1, D)
    n = x2.shape[0]
    tn = _choose_row_tile(n, D, hp, O, sample)
    n_pad = _round_up(n, tn)
    grid = (n_pad // tn,)

    # Single bf16 cast; pad only the trailing partial tile.  Padded rows are
    # all-zero -> finite outputs that are sliced off below; there is no
    # cross-row reduction in the kernel, so they cannot contaminate real rows.
    xb = x2.astype(MATMUL_DTYPE)
    if n_pad != n:
        xb = jnp.pad(xb, ((0, n_pad - n), (0, 0)))

    def resident(shape):
        return pl.BlockSpec(shape, lambda i: (0, 0))

    x_spec = pl.BlockSpec((tn, D), lambda i: (i, 0))
    y_spec = pl.BlockSpec((tn, O), lambda i: (i, 0))   # narrow, full last dim

    args = [xb]
    in_specs = [x_spec]
    if sample:
        # Host-side noise (distribution matches torch .normal_(); not bitwise
        # identical).  bf16 halves the eps HBM stream; noise in the padded
        # hidden columns multiplies zero weight rows so it never reaches y.
        # Note: the draws depend on (seed, n_pad, hp), not on the row tile.
        k1, k2 = jax.random.split(jax.random.PRNGKey(seed))
        eps1 = jax.random.normal(k1, (n_pad, hp), MATMUL_DTYPE)
        eps2 = jax.random.normal(k2, (n_pad, O), MATMUL_DTYPE)
        args += [eps1, eps2]
        in_specs += [pl.BlockSpec((tn, hp), lambda i: (i, 0)),
                     pl.BlockSpec((tn, O), lambda i: (i, 0))]

    args += [prepped["w1t"], prepped["b1p"]]
    in_specs += [resident((D, hp)), resident((1, hp))]
    if sample:
        args.append(prepped["sig1t"])
        in_specs.append(resident((D, hp)))
    args += [prepped["w2t"], prepped["b2p"]]
    in_specs += [resident((hp, O)), resident((1, O))]
    if sample:
        args.append(prepped["sig2t"])
        in_specs.append(resident((hp, O)))

    flops = 2 * n_pad * (D * hp + hp * O)
    transcendentals = 0
    if sample:
        flops *= 2
        transcendentals = n_pad * (hp + O)          # sqrt on the variance path
    bytes_accessed = sum(int(a.size) * a.dtype.itemsize for a in args) \
        + n_pad * O * 4
    cost_est = pl.CostEstimate(flops=int(flops),
                               transcendentals=int(transcendentals),
                               bytes_accessed=int(bytes_accessed))

    kernel = functools.partial(_vd_mlp_kernel, sample=sample)
    y_pad = pl.pallas_call(
        kernel,
        grid_spec=pltpu.PrefetchScalarGridSpec(
            num_scalar_prefetch=0,
            grid=grid,
            in_specs=in_specs,
            out_specs=y_spec,
        ),
        out_shape=jax.ShapeDtypeStruct((n_pad, O), jnp.float32),
        compiler_params=pltpu.CompilerParams(
            dimension_semantics=("parallel",),      # megacore sharding on v7x
            vmem_limit_bytes=48 * 1024 * 1024,      # headroom; usage << budget
        ),
        cost_estimate=cost_est,
    )(*args)

    y = y_pad[:n]
    tkl = kl_loss(W1, la1) + kl_loss(W2, la2)
    return y, tkl


# ----------------------------------------------------------------------------
# Pure-JAX reference for the deterministic (sample=False / eval) path.
# ----------------------------------------------------------------------------
def reference_forward(x, params):
    W1, b1, la1, W2, b2, la2 = params
    x2 = x.reshape(-1, W1.shape[1]).astype(jnp.float32)
    h = jnp.maximum(jnp.dot(x2, W1.T) + b1, 0.0)
    y = jnp.dot(h, W2.T) + b2
    tkl = kl_loss(W1, la1) + kl_loss(W2, la2)
    return y, tkl


if __name__ == "__main__":
    # x is NCHW and gets flattened to (-1, input_dim) inside forward.
    batch, channels, spatial = 2, 4, 16
    input_dim = spatial * spatial          # 256 -> x.view(-1, 256) gives 8 rows
    output_dim = 4
    n_hid = 50                             # deliberately non-tile-aligned

    key = jax.random.PRNGKey(0)
    kx, k1, k2 = jax.random.split(key, 3)

    x = jax.random.normal(kx, (batch, channels, spatial, spatial), jnp.float32)

    W1, b1, la1 = init_vd_linear(k1, input_dim, n_hid)
    W2, b2, la2 = init_vd_linear(k2, n_hid, 2 * output_dim)
    params = (W1, b1, la1, W2, b2, la2)
    prepped = prepare_vd_params(params)    # cached weight-side prep

    # Deterministic (eval / sample=False) path: epsilon == 0, out == mean.
    y, tkl = vd_linear_1L_hetero_forward(x, params, sample=False, prepped=prepped)
    y = jax.block_until_ready(y)
    tkl = jax.block_until_ready(tkl)

    y_ref, tkl_ref = reference_forward(x, params)
    # bf16 matmul operands with f32 accumulation -> slightly looser tolerance.
    np.testing.assert_allclose(np.asarray(y), np.asarray(y_ref),
                               rtol=2e-2, atol=2e-2)
    np.testing.assert_allclose(float(tkl), float(tkl_ref), rtol=1e-5)
    assert y.shape == (x.size // input_dim, 2 * output_dim)

    # Sampling path with the default log_alpha: noise injected, finite output.
    y_s, _ = vd_linear_1L_hetero_forward(x, params, sample=True, seed=1234,
                                         prepped=prepped)
    y_s = jax.block_until_ready(y_s)
    assert y_s.shape == y.shape
    assert bool(jnp.all(jnp.isfinite(y_s)))

    # Targeted variance-path check: with log_alpha -> -30 the variational std
    # is ~0, so the sampled output must collapse onto the deterministic mean.
    params_tiny = (W1, b1, jnp.full_like(la1, -30.0),
                   W2, b2, jnp.full_like(la2, -30.0))
    y_t, _ = vd_linear_1L_hetero_forward(x, params_tiny, sample=True, seed=7)
    y_t = jax.block_until_ready(y_t)
    np.testing.assert_allclose(np.asarray(y_t), np.asarray(y_ref),
                               rtol=2e-2, atol=2e-2)

    print("KERNEL_OK")
</pallas_src>

<mosaic_0001>
module attributes {stable_mosaic.version = 11 : i64} {
  func.func @_vd_mlp_kernel(%arg0: i32, %arg1: memref<16x256xbf16, #tpu.memory_space<vmem>>, %arg2: memref<256x128xbf16, #tpu.memory_space<vmem>>, %arg3: memref<1x128xf32, #tpu.memory_space<vmem>>, %arg4: memref<128x8xbf16, #tpu.memory_space<vmem>>, %arg5: memref<1x8xf32, #tpu.memory_space<vmem>>, %arg6: memref<16x8xf32, #tpu.memory_space<vmem>>) attributes {dimension_semantics = [#tpu.dimension_semantics<parallel>], iteration_bounds = array<i64: 1>, scalar_prefetch = 0 : i64, scratch_operands = 0 : i64, tpu.core_type = #tpu.core_type<tc>, window_params = [{transform_indices = @transform_0, window_bounds = array<i64: 16, 256>}, {pipeline_mode = #tpu.pipeline_mode<synchronous>, transform_indices = @transform_1, window_bounds = array<i64: 256, 128>}, {pipeline_mode = #tpu.pipeline_mode<synchronous>, transform_indices = @transform_2, window_bounds = array<i64: 1, 128>}, {pipeline_mode = #tpu.pipeline_mode<synchronous>, transform_indices = @transform_3, window_bounds = array<i64: 128, 8>}, {pipeline_mode = #tpu.pipeline_mode<synchronous>, transform_indices = @transform_4, window_bounds = array<i64: 1, 8>}, {transform_indices = @transform_5, window_bounds = array<i64: 16, 8>}]} {
    %c0 = arith.constant 0 : index
    %c0_0 = arith.constant 0 : index
    %0 = vector.load %arg1[%c0, %c0_0] : memref<16x256xbf16, #tpu.memory_space<vmem>>, vector<16x256xbf16>
    %c0_1 = arith.constant 0 : index
    %c0_2 = arith.constant 0 : index
    %1 = vector.load %arg2[%c0_1, %c0_2] : memref<256x128xbf16, #tpu.memory_space<vmem>>, vector<256x128xbf16>
    %cst = arith.constant dense<0.000000e+00> : vector<16x128xf32>
    %2 = tpu.matmul %0, %1, %cst {dimension_numbers = #tpu.dot_dimension_numbers<[1], [0], [0], [1], [0, 0, 1, 1], [], []>} : vector<16x256xbf16>, vector<256x128xbf16>, vector<16x128xf32> -> vector<16x128xf32>
    %c0_3 = arith.constant 0 : index
    %c0_4 = arith.constant 0 : index
    %3 = vector.load %arg3[%c0_3, %c0_4] : memref<1x128xf32, #tpu.memory_space<vmem>>, vector<1x128xf32>
    %4 = vector.broadcast %3 : vector<1x128xf32> to vector<16x128xf32>
    %5 = arith.addf %2, %4 : vector<16x128xf32>
    %cst_5 = arith.constant 0.000000e+00 : f32
    %6 = vector.broadcast %cst_5 : f32 to vector<16x128xf32>
    %7 = arith.maximumf %5, %6 : vector<16x128xf32>
    %8 = arith.truncf %7 : vector<16x128xf32> to vector<16x128xbf16>
    %c0_6 = arith.constant 0 : index
    %c0_7 = arith.constant 0 : index
    %9 = vector.load %arg4[%c0_6, %c0_7] : memref<128x8xbf16, #tpu.memory_space<vmem>>, vector<128x8xbf16>
    %cst_8 = arith.constant dense<0.000000e+00> : vector<16x8xf32>
    %10 = tpu.matmul %8, %9, %cst_8 {dimension_numbers = #tpu.dot_dimension_numbers<[1], [0], [0], [1], [0, 0, 1, 1], [], []>} : vector<16x128xbf16>, vector<128x8xbf16>, vector<16x8xf32> -> vector<16x8xf32>
    %c0_9 = arith.constant 0 : index
    %c0_10 = arith.constant 0 : index
    %11 = vector.load %arg5[%c0_9, %c0_10] : memref<1x8xf32, #tpu.memory_space<vmem>>, vector<1x8xf32>
    %12 = vector.broadcast %11 : vector<1x8xf32> to vector<16x8xf32>
    %13 = arith.addf %10, %12 : vector<16x8xf32>
    %c0_11 = arith.constant 0 : index
    %c0_12 = arith.constant 0 : index
    %14 = vector.load %arg6[%c0_11, %c0_12] : memref<16x8xf32, #tpu.memory_space<vmem>>, vector<16x8xf32>
    tpu.vector_store %arg6[%c0_11, %c0_12], %13 {strides = array<i32>} : memref<16x8xf32, #tpu.memory_space<vmem>>, vector<16x8xf32>,
    return
  }
  func.func @transform_0(%arg0: i32) -> (i32, i32) {
    %c0_i32 = arith.constant 0 : i32
    %c0_i32_0 = arith.constant 0 : i32
    return %arg0, %c0_i32 : i32, i32
  }
  func.func @transform_1(%arg0: i32) -> (i32, i32) {
    %c0_i32 = arith.constant 0 : i32
    %c0_i32_0 = arith.constant 0 : i32
    %c0_i32_1 = arith.constant 0 : i32
    return %c0_i32, %c0_i32_0 : i32, i32
  }
  func.func @transform_2(%arg0: i32) -> (i32, i32) {
    %c0_i32 = arith.constant 0 : i32
    %c0_i32_0 = arith.constant 0 : i32
    %c0_i32_1 = arith.constant 0 : i32
    return %c0_i32, %c0_i32_0 : i32, i32
  }
  func.func @transform_3(%arg0: i32) -> (i32, i32) {
    %c0_i32 = arith.constant 0 : i32
    %c0_i32_0 = arith.constant 0 : i32
    %c0_i32_1 = arith.constant 0 : i32
    return %c0_i32, %c0_i32_0 : i32, i32
  }
  func.func @transform_4(%arg0: i32) -> (i32, i32) {
    %c0_i32 = arith.constant 0 : i32
    %c0_i32_0 = arith.constant 0 : i32
    %c0_i32_1 = arith.constant 0 : i32
    return %c0_i32, %c0_i32_0 : i32, i32
  }
  func.func @transform_5(%arg0: i32) -> (i32, i32) {
    %c0_i32 = arith.constant 0 : i32
    %c0_i32_0 = arith.constant 0 : i32
    return %arg0, %c0_i32 : i32, i32
  }
}

</mosaic_0001>

<llo_original>
// kernel: tpu_custom_call.1
$region0: #{tpu_custom_call.1}
  #allocation0 [shape = 'u32[]', space=smem, size = 0x4, offset = 0x4, fixed_abs, tag = 'smem constant byte address 0x4 - core index']
  #allocation1 [shape = 'u32[144,128]{1,0:T(1,128)}', space=vmem, size = 0x12000, scoped, tag = 'internal scratch']
  %s0 = inlined_call_operand.vmem [shape: bf16[16,256], index: 0, kind: input, shape index: {}]
  %s1 = inlined_call_operand.hbm [shape: bf16[256,128], index: 1, kind: input, shape index: {}]
  %s2 = inlined_call_operand.vmem [shape: f32[1,128], index: 2, kind: input, shape index: {}]
  %s3 = inlined_call_operand.vmem [shape: bf16[128,8], index: 3, kind: input, shape index: {}]
  %s4 = inlined_call_operand.vmem [shape: f32[1,8], index: 4, kind: input, shape index: {}]
  %s5 = inlined_call_operand.vmem [shape: f32[16,8], index: 5, kind: output, shape index: {}]
  %s6 = sld [smem:[#allocation0]]
  $region34: #{tpu_custom_call.1} parent=0
    _
  %s8 = ssub.s32 1, %s6
  %s9 = scalar_select 0, %s8, %s6
  $region1: #{tpu_custom_call.1} parent=0
    #allocation2 [shape = 'u8[65536]{0}', space=vmem, size = 0x10000, scoped, tag = 'input window, operand 1, single buffered']
    #allocation3 [shape = 's32[1]{0}', space=sflag, size = 0x4, scoped, tag = 'scoped memory for tpu_custom_call.1']
    %10 = vsyncpa [#allocation3], 0
    // Predicated region
    $region2: #{tpu_custom_call.1} parent=1 // pred_check
      _
    $region3: #{tpu_custom_call.1} parent=1 // pred_check_branch
      %12 = sbr.rel (0) target = $region5
    $region4: #{tpu_custom_call.1} parent=1 // pred_region
      _
    $region5: #{tpu_custom_call.1} parent=1 // pred_fallthru
      _
    // Predicated region
    $region6: #{tpu_custom_call.1} parent=1 // pred_check
      _
    $region7: #{tpu_custom_call.1} parent=1 // pred_check_branch
      %14 = sbr.rel (0) target = $region9
    $region8: #{tpu_custom_call.1} parent=1 // pred_region
      %s16 = ssub.s32 2048, 2048
      %17 = vsyncadd [#allocation3], %s16
      %s18 = sshll.u32 [#allocation2], 4
      %s19 = int_to_ptr.vmem [resolvable:$true] %s18
      %24 = dma.hbm_to_vmem [thread:$0]  %s1, 2048, %s19, [#allocation3], 64, 64, 4
    $region9: #{tpu_custom_call.1} parent=1 // pred_fallthru
      _
    // Predicated region
    $region10: #{tpu_custom_call.1} parent=1 // pred_check
      _
    $region11: #{tpu_custom_call.1} parent=1 // pred_check_branch
      %26 = sbr.rel (0) target = $region13
    $region12: #{tpu_custom_call.1} parent=1 // pred_region
      _
    $region13: #{tpu_custom_call.1} parent=1 // pred_fallthru
      _
    // Predicated region
    $region14: #{tpu_custom_call.1} parent=1 // pred_check
      _
    $region15: #{tpu_custom_call.1} parent=1 // pred_check_branch
      %28 = sbr.rel (0) target = $region17
    $region16: #{tpu_custom_call.1} parent=1 // pred_region
      _
    $region17: #{tpu_custom_call.1} parent=1 // pred_fallthru
      _
    // Predicated region
    $region18: #{tpu_custom_call.1} parent=1 // pred_check
      _
    $region19: #{tpu_custom_call.1} parent=1 // pred_check_branch
      %30 = sbr.rel (0) target = $region21
    $region20: #{tpu_custom_call.1} parent=1 // pred_region
      _
    $region21: #{tpu_custom_call.1} parent=1 // pred_fallthru
      _
    // Predicated region
    $region22: #{tpu_custom_call.1} parent=1 // pred_check
      _
    $region23: #{tpu_custom_call.1} parent=1 // pred_check_branch
      %32 = sbr.rel (0) target = $region25
    $region24: #{tpu_custom_call.1} parent=1 // pred_region
      %33 = dma.done [#allocation3], 2048
    $region25: #{tpu_custom_call.1} parent=1 // pred_fallthru
      _
    %v35 = vld [vmem:[%s0] sm:$0xff]
    %v36 = vld [vmem:[%s0 + $0x8] sm:$0xff]
    %v37 = vld [vmem:[#allocation2] sm:$0xf]
    %v38 = vld [vmem:[#allocation2 + $0x4] sm:$0xf]
    %v39 = vld [vmem:[#allocation2 + $0x8] sm:$0xf]
    %v40 = vld [vmem:[#allocation2 + $0xc] sm:$0xf]
    %v41 = vld [vmem:[#allocation2 + $0x10] sm:$0xf]
    %v42 = vld [vmem:[#allocation2 + $0x14] sm:$0xf]
    %v43 = vld [vmem:[#allocation2 + $0x18] sm:$0xf]
    %v44 = vld [vmem:[#allocation2 + $0x1c] sm:$0xf]
    %v45 = vld [vmem:[#allocation2 + $0x20] sm:$0xf]
    %v46 = vld [vmem:[#allocation2 + $0x24] sm:$0xf]
    %v47 = vld [vmem:[#allocation2 + $0x28] sm:$0xf]
    %v48 = vld [vmem:[#allocation2 + $0x2c] sm:$0xf]
    %v49 = vld [vmem:[#allocation2 + $0x30] sm:$0xf]
    %v50 = vld [vmem:[#allocation2 + $0x34] sm:$0xf]
    %v51 = vld [vmem:[#allocation2 + $0x38] sm:$0xf]
    %v52 = vld [vmem:[#allocation2 + $0x3c] sm:$0xf]
    %v53 = vld [vmem:[#allocation2 + $0x40] sm:$0xf]
    %v54 = vld [vmem:[#allocation2 + $0x44] sm:$0xf]
    %v55 = vld [vmem:[#allocation2 + $0x48] sm:$0xf]
    %v56 = vld [vmem:[#allocation2 + $0x4c] sm:$0xf]
    %v57 = vld [vmem:[#allocation2 + $0x50] sm:$0xf]
    %v58 = vld [vmem:[#allocation2 + $0x54] sm:$0xf]
    %v59 = vld [vmem:[#allocation2 + $0x58] sm:$0xf]
    %v60 = vld [vmem:[#allocation2 + $0x5c] sm:$0xf]
    %v61 = vld [vmem:[#allocation2 + $0x60] sm:$0xf]
    %v62 = vld [vmem:[#allocation2 + $0x64] sm:$0xf]
    %v63 = vld [vmem:[#allocation2 + $0x68] sm:$0xf]
    %v64 = vld [vmem:[#allocation2 + $0x6c] sm:$0xf]
    %v65 = vld [vmem:[#allocation2 + $0x70] sm:$0xf]
    %v66 = vld [vmem:[#allocation2 + $0x74] sm:$0xf]
    %v67 = vld [vmem:[#allocation2 + $0x78] sm:$0xf]
    %v68 = vld [vmem:[#allocation2 + $0x7c] sm:$0xf]
    %v69 = vld [vmem:[%s2] sm:$0x1]
    %v71 = vlaneseq
    %v72 = vshrl.u32 %v71, 7
    %v73 = vsub.s32 0, %v72
    %v74 = vrot.slane %v69, %v73
    %v78 = vunpack.c.l.b16 %v35
    %v79 = vunpack.c.h.b16 %v35
    %v80 = vunpack.c.l.b16 %v36
    %v81 = vunpack.c.h.b16 %v36
    %v82 = vpack.c.b16 %v80, %v78
    %v83 = vpack.c.b16 %v81, %v79
    %v118 = vunpack.c.l.b16 %v37
    %v119 = vunpack.c.l.b16 %v38
    %v120 = vunpack.c.l.b16 %v39
    %v121 = vunpack.c.l.b16 %v40
    %v122 = vunpack.c.l.b16 %v41
    %v123 = vunpack.c.l.b16 %v42
    %v124 = vunpack.c.l.b16 %v43
    %v125 = vunpack.c.l.b16 %v44
    %v126 = vunpack.c.l.b16 %v45
    %v127 = vunpack.c.l.b16 %v46
    %v128 = vunpack.c.l.b16 %v47
    %v129 = vunpack.c.l.b16 %v48
    %v130 = vunpack.c.l.b16 %v49
    %v131 = vunpack.c.l.b16 %v50
    %v132 = vunpack.c.l.b16 %v51
    %v133 = vunpack.c.l.b16 %v52
    %v134 = vunpack.c.l.b16 %v53
    %v135 = vunpack.c.l.b16 %v54
    %v136 = vunpack.c.l.b16 %v55
    %v137 = vunpack.c.l.b16 %v56
    %v138 = vunpack.c.l.b16 %v57
    %v139 = vunpack.c.l.b16 %v58
    %v140 = vunpack.c.l.b16 %v59
    %v141 = vunpack.c.l.b16 %v60
    %v142 = vunpack.c.l.b16 %v61
    %v143 = vunpack.c.l.b16 %v62
    %v144 = vunpack.c.l.b16 %v63
    %v145 = vunpack.c.l.b16 %v64
    %v146 = vunpack.c.l.b16 %v65
    %v147 = vunpack.c.l.b16 %v66
    %v148 = vunpack.c.l.b16 %v67
    %v149 = vunpack.c.l.b16 %v68
    %v150 = vpack.c.b16 %v119, %v118
    %v151 = vpack.c.b16 %v121, %v120
    %v152 = vpack.c.b16 %v123, %v122
    %v153 = vpack.c.b16 %v125, %v124
    %v154 = vpack.c.b16 %v127, %v126
    %v155 = vpack.c.b16 %v129, %v128
    %v156 = vpack.c.b16 %v131, %v130
    %v157 = vpack.c.b16 %v133, %v132
    %v158 = vpack.c.b16 %v135, %v134
    %v159 = vpack.c.b16 %v137, %v136
    %v160 = vpack.c.b16 %v139, %v138
    %v161 = vpack.c.b16 %v141, %v140
    %v162 = vpack.c.b16 %v143, %v142
    %v163 = vpack.c.b16 %v145, %v144
    %v164 = vpack.c.b16 %v147, %v146
    %v165 = vpack.c.b16 %v149, %v148
    %182 = vmatprep.subr.bf16.mxu0 0
    %183 = vmatpush1.bf16.msra.mxu0 %v150
    %184 = vmatprep.subr.bf16.mxu0 0
    %185 = vmatpush1.bf16.msra.mxu0 %v151
    %186 = vmatprep.subr.bf16.mxu0 0
    %187 = vmatpush1.bf16.msra.mxu0 %v152
    %188 = vmatprep.subr.bf16.mxu0 0
    %189 = vmatpush1.bf16.msra.mxu0 %v153
    %190 = vmatprep.subr.bf16.mxu0 0
    %191 = vmatpush1.bf16.msra.mxu0 %v154
    %192 = vmatprep.subr.bf16.mxu0 0
    %193 = vmatpush1.bf16.msra.mxu0 %v155
    %194 = vmatprep.subr.bf16.mxu0 0
    %195 = vmatpush1.bf16.msra.mxu0 %v156
    %196 = vmatprep.subr.bf16.mxu0 0
    %197 = vmatpush1.bf16.msra.mxu0 %v157
    %198 = vmatprep.subr.bf16.mxu0 0
    %199 = vmatpush1.bf16.msra.mxu0 %v158
    %200 = vmatprep.subr.bf16.mxu0 0
    %201 = vmatpush1.bf16.msra.mxu0 %v159
    %202 = vmatprep.subr.bf16.mxu0 0
    %203 = vmatpush1.bf16.msra.mxu0 %v160
    %204 = vmatprep.subr.bf16.mxu0 0
    %205 = vmatpush1.bf16.msra.mxu0 %v161
    %206 = vmatprep.subr.bf16.mxu0 0
    %207 = vmatpush1.bf16.msra.mxu0 %v162
    %208 = vmatprep.subr.bf16.mxu0 0
    %209 = vmatpush1.bf16.msra.mxu0 %v163
    %210 = vmatprep.subr.bf16.mxu0 0
    %211 = vmatpush1.bf16.msra.mxu0 %v164
    %212 = vmatprep.subr.bf16.mxu0 0
    %213 = vmatpush1.bf16.msra.mxu0 %v165
    %214 = vmatprep.mubr.bf16.mxu0 %v83
    %215 = vmatmul.mubr.bf16.gmra.mrb[0].mxu0 %v82
    %v216 = vpop.f32.mrb[0].mxu0
    %v217 = vadd.f32 %v74, %v216
    %v218 = vpop.f32.mrb[0].mxu0
    %v219 = vpop.f32.mrb[0].mxu0
    %v220 = vadd.f32 %v74, %v219
    %v221 = vpop.f32.mrb[0].mxu0
    %222 = vdwg.mxu0
    %v223 = vmax.f32 %v217, 0.0
    %v224 = vmax.f32 %v220, 0.0
    %v225 = vpack.c.bf16 %v224, %v223
    %v226 = vld [vmem:[%s3] sm:$0xf]
    %v227 = vld [vmem:[%s3 + $0x4] sm:$0xf]
    %v228 = vld [vmem:[%s3 + $0x8] sm:$0xf]
    %v229 = vld [vmem:[%s3 + $0xc] sm:$0xf]
    %v230 = vld [vmem:[%s3 + $0x10] sm:$0xf]
    %v231 = vld [vmem:[%s3 + $0x14] sm:$0xf]
    %v232 = vld [vmem:[%s3 + $0x18] sm:$0xf]
    %v233 = vld [vmem:[%s3 + $0x1c] sm:$0xf]
    %v234 = vld [vmem:[%s3 + $0x20] sm:$0xf]
    %v235 = vld [vmem:[%s3 + $0x24] sm:$0xf]
    %v236 = vld [vmem:[%s3 + $0x28] sm:$0xf]
    %v237 = vld [vmem:[%s3 + $0x2c] sm:$0xf]
    %v238 = vld [vmem:[%s3 + $0x30] sm:$0xf]
    %v239 = vld [vmem:[%s3 + $0x34] sm:$0xf]
    %v240 = vld [vmem:[%s3 + $0x38] sm:$0xf]
    %v241 = vld [vmem:[%s3 + $0x3c] sm:$0xf]
    %v242 = vld [vmem:[%s4] sm:$0x1]
    %v244 = vlaneseq
    %v245 = vshrl.u32 %v244, 7
    %v246 = vsub.s32 0, %v245
    %v247 = vrot.slane %v242, %v246
    %v265 = vunpack.c.l.b16 %v226
    %v266 = vunpack.c.l.b16 %v227
    %v267 = vunpack.c.l.b16 %v228
    %v268 = vunpack.c.l.b16 %v229
    %v269 = vunpack.c.l.b16 %v230
    %v270 = vunpack.c.l.b16 %v231
    %v271 = vunpack.c.l.b16 %v232
    %v272 = vunpack.c.l.b16 %v233
    %v273 = vunpack.c.l.b16 %v234
    %v274 = vunpack.c.l.b16 %v235
    %v275 = vunpack.c.l.b16 %v236
    %v276 = vunpack.c.l.b16 %v237
    %v277 = vunpack.c.l.b16 %v238
    %v278 = vunpack.c.l.b16 %v239
    %v279 = vunpack.c.l.b16 %v240
    %v280 = vunpack.c.l.b16 %v241
    %v281 = vpack.c.b16 %v266, %v265
    %v282 = vpack.c.b16 %v268, %v267
    %v283 = vpack.c.b16 %v270, %v269
    %v284 = vpack.c.b16 %v272, %v271
    %v285 = vpack.c.b16 %v274, %v273
    %v286 = vpack.c.b16 %v276, %v275
    %v287 = vpack.c.b16 %v278, %v277
    %v288 = vpack.c.b16 %v280, %v279
    %297 = vmatprep.subr.bf16.mxu0 0
    %298 = vmatpush1.bf16.msra.mxu0 %v281
    %299 = vmatprep.subr.bf16.mxu0 0
    %300 = vmatpush1.bf16.msra.mxu0 %v282
    %301 = vmatprep.subr.bf16.mxu0 0
    %302 = vmatpush1.bf16.msra.mxu0 %v283
    %303 = vmatprep.subr.bf16.mxu0 0
    %304 = vmatpush1.bf16.msra.mxu0 %v284
    %305 = vmatprep.subr.bf16.mxu0 0
    %306 = vmatpush1.bf16.msra.mxu0 %v285
    %307 = vmatprep.subr.bf16.mxu0 0
    %308 = vmatpush1.bf16.msra.mxu0 %v286
    %309 = vmatprep.subr.bf16.mxu0 0
    %310 = vmatpush1.bf16.msra.mxu0 %v287
    %311 = vmatprep.subr.bf16.mxu0 0
    %312 = vmatpush1.bf16.msra.mxu0 %v288
    %313 = vmatprep.subr.bf16.mxu0 0
    %314 = vmatpush1.bf16.msra.mxu0 0
    %315 = vmatprep.subr.bf16.mxu0 0
    %316 = vmatpush1.bf16.msra.mxu0 0
    %317 = vmatprep.subr.bf16.mxu0 0
    %318 = vmatpush1.bf16.msra.mxu0 0
    %319 = vmatprep.subr.bf16.mxu0 0
    %320 = vmatpush1.bf16.msra.mxu0 0
    %321 = vmatprep.subr.bf16.mxu0 0
    %322 = vmatpush1.bf16.msra.mxu0 0
    %323 = vmatprep.subr.bf16.mxu0 0
    %324 = vmatpush1.bf16.msra.mxu0 0
    %325 = vmatprep.subr.bf16.mxu0 0
    %326 = vmatpush1.bf16.msra.mxu0 0
    %327 = vmatprep.subr.bf16.mxu0 0
    %328 = vmatpush1.bf16.msra.mxu0 0
    %329 = vmatprep.mubr.bf16.mxu0 0
    %330 = vmatmul.mubr.bf16.gmra.mrb[0].mxu0 %v225
    %v331 = vpop.f32.mrb[0].mxu0
    %v332 = vadd.f32 %v247, %v331
    %v333 = vpop.f32.mrb[0].mxu0
    %v334 = vpop.f32.mrb[0].mxu0
    %v335 = vadd.f32 %v247, %v334
    %v336 = vpop.f32.mrb[0].mxu0
    %337 = vdwg.mxu0
    %vm338 = vcmask 64512
    %339 = vst.msk [vmem:[%s5] sm:$0xff] %vm338, %v332
    %340 = vst.msk [vmem:[%s5 + $0x8] sm:$0xff] %vm338, %v335
    // Predicated region
    $region26: #{tpu_custom_call.1} parent=1 // pred_check
      _
    $region27: #{tpu_custom_call.1} parent=1 // pred_check_branch
      %342 = sbr.rel (0) target = $region29
    $region28: #{tpu_custom_call.1} parent=1 // pred_region
      _
    $region29: #{tpu_custom_call.1} parent=1 // pred_fallthru
      _
    // Predicated region
    $region30: #{tpu_custom_call.1} parent=1 // pred_check
      _
    $region31: #{tpu_custom_call.1} parent=1 // pred_check_branch
      %344 = sbr.rel (0) target = $region33
    $region32: #{tpu_custom_call.1} parent=1 // pred_region
      _
    $region33: #{tpu_custom_call.1} parent=1 // pred_fallthru
      _
    %345 = vsyncpa [#allocation3], 1

</llo_original>
